<compile_context>
chip_gen: v5e
topology: v5e:2x2
jax: 0.10.0
libtpu: 0.0.40
codegen_flags: <defaults>
</compile_context>

<pallas_src>
import math

import jax
import jax.numpy as jnp
from jax.experimental import pallas as pl
from jax.experimental.pallas import tpu as pltpu


def _round_up(x, m):
    return (x + m - 1) // m * m


def _vmem_capacity_bytes():
    """Physical VMEM per TensorCore (128 MiB v5e/v6e, 64 MiB v7x).
    Falls back to the smallest (v7x) value if the query is unavailable."""
    try:
        cap = int(getattr(pltpu.get_tpu_info(), "vmem_capacity_bytes", 0))
        if cap > 0:
            return cap
    except Exception:
        pass
    return 64 << 20


def mlp_kernel(x_ref, w1_ref, b1_ref, w2_ref, b2_ref, w3_ref, b3_ref, o_ref):
    # Fused 3-layer MLP on one batch tile. All parameter tiles are VMEM
    # resident (constant index_map), so each grid step only streams x.
    x = x_ref[...]
    h1 = jnp.dot(x, w1_ref[...], preferred_element_type=jnp.float32) + b1_ref[...]
    h1 = jnp.maximum(h1, 0.0)                                        # ReLU (f32)
    h2 = jnp.dot(h1.astype(w2_ref.dtype), w2_ref[...],
                 preferred_element_type=jnp.float32) + b2_ref[...]
    h2 = jnp.maximum(h2, 0.0)                                        # ReLU (f32)
    h3 = jnp.dot(h2.astype(w3_ref.dtype), w3_ref[...],
                 preferred_element_type=jnp.float32) + b3_ref[...]
    o_ref[...] = h3.astype(o_ref.dtype)


def net_forward(x, params, *, tile_b=None):
    """x: [B, F] (float32 or bfloat16); params: dict from init_params.

    Returns float32 logits of shape [B, 2]."""
    B, F = x.shape
    w1, b1 = params["w1"], params["b1"]
    w2, b2 = params["w2"], params["b2"]
    w3, b3 = params["w3"], params["b3"]
    x_isz = jnp.dtype(x.dtype).itemsize
    w_isz = jnp.dtype(w1.dtype).itemsize

    # --- Tile-size selection (generation aware, padding aware) ---------------
    sub = max(8, 32 // x_isz)        # sublane packing: 8 f32 / 16 bf16 / 32 int8
    Fp = _round_up(F, 128)           # lanes the x tile really occupies in VMEM
    vmem_cap = _vmem_capacity_bytes()

    # VMEM bytes per batch row while one tile is live (double buffers + f32
    # intermediates; every minor dim rounded up to the 128-lane vreg width).
    per_row = (2 * Fp * x_isz        # double-buffered x tile
               + 2 * 128 * 4         # double-buffered f32 output tile (2 -> 128)
               + 3 * 128 * 4)        # f32 intermediates h1/h2/h3 (<=64 -> 128)
    # Padded VMEM-resident parameters (tiny, but counted):
    param_vmem = 2 * (_round_up(F, 32) * 128 + 4 * 64 * 128) * w_isz

    budget = int(vmem_cap * 0.6) - param_vmem - (2 << 20)
    cap_rows = max(sub, (budget // per_row) // sub * sub)

    if tile_b is None:
        if B > 2 * sub:
            # >= 2 grid steps so ("parallel",) megacore sharding feeds both v7x
            # TensorCores; on single-TC v5e/v6e the extra step costs ~0.35 us.
            tile_b = min(cap_rows, _round_up(pl.cdiv(B, 2), sub))
        else:
            tile_b = min(cap_rows, B)          # single full-extent block
    else:
        tile_b = min(_round_up(max(tile_b, sub), sub), cap_rows)
        if tile_b >= B:
            tile_b = B

    # Ragged last block: handled by Pallas boundary masking (no jnp.pad copy).
    # Rows are independent, so unspecified data in the OOB part of the last x
    # tile only produces OOB output rows, which are discarded on store.
    num_tiles = pl.cdiv(B, tile_b)

    # --- VMEM limit + cost hint ----------------------------------------------
    param_bytes = sum(int(p.size) * jnp.dtype(p.dtype).itemsize
                      for p in (w1, b1, w2, b2, w3, b3))
    footprint = (2 * tile_b * Fp * x_isz       # x double buffer (lane padded)
                 + 2 * tile_b * 128 * 4        # out double buffer (lane padded)
                 + 4 * tile_b * 128 * 4        # f32 intermediates + slack
                 + param_vmem
                 + (4 << 20))                  # headroom
    vmem_bytes = int(min(max(footprint, 32 << 20), int(vmem_cap * 0.9)))

    cost = pl.CostEstimate(
        flops=2 * B * (F * 64 + 64 * 16 + 16 * 2),
        transcendentals=0,
        bytes_accessed=B * F * x_isz + B * 2 * 4 + param_bytes,
    )

    out = pl.pallas_call(
        mlp_kernel,
        out_shape=jax.ShapeDtypeStruct((B, 2), jnp.float32),
        grid_spec=pltpu.PrefetchScalarGridSpec(
            num_scalar_prefetch=0,
            grid=(num_tiles,),
            in_specs=[
                pl.BlockSpec((tile_b, F), lambda i: (i, 0)),   # x: batch-tiled
                pl.BlockSpec((F, 64), lambda i: (0, 0)),       # params resident
                pl.BlockSpec((1, 64), lambda i: (0, 0)),
                pl.BlockSpec((64, 16), lambda i: (0, 0)),
                pl.BlockSpec((1, 16), lambda i: (0, 0)),
                pl.BlockSpec((16, 2), lambda i: (0, 0)),
                pl.BlockSpec((1, 2), lambda i: (0, 0)),
            ],
            out_specs=pl.BlockSpec((tile_b, 2), lambda i: (i, 0)),
        ),
        compiler_params=pltpu.CompilerParams(
            dimension_semantics=("parallel",),   # megacore shard on v7x
            vmem_limit_bytes=vmem_bytes,
        ),
        cost_estimate=cost,
    )(x, w1, b1, w2, b2, w3, b3)

    return out


def init_params(key, features, dtype=jnp.float32):
    """PyTorch nn.Linear default init: U(-1/sqrt(fan_in), 1/sqrt(fan_in)).
    Weights stored as [in, out] (transpose of PyTorch's [out, in])."""
    def linear(k, fan_in, fan_out):
        kw, kb = jax.random.split(k)
        bound = 1.0 / math.sqrt(fan_in)
        w = jax.random.uniform(kw, (fan_in, fan_out), jnp.float32, -bound, bound)
        b = jax.random.uniform(kb, (1, fan_out), jnp.float32, -bound, bound)
        return w.astype(dtype), b.astype(dtype)

    k1, k2, k3 = jax.random.split(key, 3)
    w1, b1 = linear(k1, features, 64)
    w2, b2 = linear(k2, 64, 16)
    w3, b3 = linear(k3, 16, 2)
    return {"w1": w1, "b1": b1, "w2": w2, "b2": b2, "w3": w3, "b3": b3}


def reference_forward(x, params):
    x = x.astype(jnp.float32)
    p = {k: v.astype(jnp.float32) for k, v in params.items()}
    h1 = jnp.maximum(x @ p["w1"] + p["b1"], 0.0)
    h2 = jnp.maximum(h1 @ p["w2"] + p["b2"], 0.0)
    return h2 @ p["w3"] + p["b3"]


if __name__ == "__main__":
    key = jax.random.PRNGKey(0)
    kx, kp = jax.random.split(key)

    batch, features = 8, 32
    x = jax.random.normal(kx, (batch, features), dtype=jnp.float32)
    params = init_params(kp, features)

    # float32 path, single full-extent block (tight tolerance).
    out = jax.block_until_ready(net_forward(x, params))
    ref = reference_forward(x, params)
    assert out.shape == (batch, 2), out.shape
    assert jnp.allclose(out, ref, atol=1e-5, rtol=1e-5), "f32 mismatch vs reference"

    # Non-tile-multiple batch: exercises multi-step grid + Pallas's masked
    # partial last block (no wrapper-side padding copy anymore).
    big_b = 1000
    xb = jax.random.normal(kx, (big_b, features), dtype=jnp.float32)
    out_b = jax.block_until_ready(net_forward(xb, params))
    ref_b = reference_forward(xb, params)
    assert out_b.shape == (big_b, 2)
    assert jnp.allclose(out_b, ref_b, atol=1e-4, rtol=1e-4), "tiled f32 mismatch"

    # bfloat16 path (halves HBM traffic of x; f32 accumulation in-kernel),
    # small batch + ragged multi-tile batch (16-row sublane-packed tiles).
    x_bf16 = x.astype(jnp.bfloat16)
    params_bf16 = {k: v.astype(jnp.bfloat16) for k, v in params.items()}
    out_bf16 = jax.block_until_ready(net_forward(x_bf16, params_bf16))
    ref_bf16 = reference_forward(x_bf16, params_bf16)
    assert out_bf16.shape == (batch, 2)
    assert jnp.allclose(out_bf16, ref_bf16, atol=5e-2, rtol=5e-2), "bf16 mismatch"

    xb_bf16 = xb.astype(jnp.bfloat16)
    out_bb = jax.block_until_ready(net_forward(xb_bf16, params_bf16))
    ref_bb = reference_forward(xb_bf16, params_bf16)
    assert out_bb.shape == (big_b, 2)
    assert jnp.allclose(out_bb, ref_bb, atol=5e-2, rtol=5e-2), "tiled bf16 mismatch"

    print("KERNEL_OK")
</pallas_src>

<mosaic_0001>
module attributes {stable_mosaic.version = 11 : i64} {
  func.func @mlp_kernel(%arg0: i32, %arg1: memref<8x32xf32, #tpu.memory_space<vmem>>, %arg2: memref<32x64xf32, #tpu.memory_space<vmem>>, %arg3: memref<1x64xf32, #tpu.memory_space<vmem>>, %arg4: memref<64x16xf32, #tpu.memory_space<vmem>>, %arg5: memref<1x16xf32, #tpu.memory_space<vmem>>, %arg6: memref<16x2xf32, #tpu.memory_space<vmem>>, %arg7: memref<1x2xf32, #tpu.memory_space<vmem>>, %arg8: memref<8x2xf32, #tpu.memory_space<vmem>>) attributes {dimension_semantics = [#tpu.dimension_semantics<parallel>], iteration_bounds = array<i64: 1>, scalar_prefetch = 0 : i64, scratch_operands = 0 : i64, tpu.core_type = #tpu.core_type<tc>, window_params = [{transform_indices = @transform_0, window_bounds = array<i64: 8, 32>}, {pipeline_mode = #tpu.pipeline_mode<synchronous>, transform_indices = @transform_1, window_bounds = array<i64: 32, 64>}, {pipeline_mode = #tpu.pipeline_mode<synchronous>, transform_indices = @transform_2, window_bounds = array<i64: 1, 64>}, {pipeline_mode = #tpu.pipeline_mode<synchronous>, transform_indices = @transform_3, window_bounds = array<i64: 64, 16>}, {pipeline_mode = #tpu.pipeline_mode<synchronous>, transform_indices = @transform_4, window_bounds = array<i64: 1, 16>}, {pipeline_mode = #tpu.pipeline_mode<synchronous>, transform_indices = @transform_5, window_bounds = array<i64: 16, 2>}, {pipeline_mode = #tpu.pipeline_mode<synchronous>, transform_indices = @transform_6, window_bounds = array<i64: 1, 2>}, {transform_indices = @transform_7, window_bounds = array<i64: 8, 2>}]} {
    %c0 = arith.constant 0 : index
    %c0_0 = arith.constant 0 : index
    %0 = vector.load %arg1[%c0, %c0_0] : memref<8x32xf32, #tpu.memory_space<vmem>>, vector<8x32xf32>
    %c0_1 = arith.constant 0 : index
    %c0_2 = arith.constant 0 : index
    %1 = vector.load %arg2[%c0_1, %c0_2] : memref<32x64xf32, #tpu.memory_space<vmem>>, vector<32x64xf32>
    %cst = arith.constant dense<0.000000e+00> : vector<8x64xf32>
    %2 = tpu.matmul %0, %1, %cst {dimension_numbers = #tpu.dot_dimension_numbers<[1], [0], [0], [1], [0, 0, 1, 1], [], []>} : vector<8x32xf32>, vector<32x64xf32>, vector<8x64xf32> -> vector<8x64xf32>
    %c0_3 = arith.constant 0 : index
    %c0_4 = arith.constant 0 : index
    %3 = vector.load %arg3[%c0_3, %c0_4] : memref<1x64xf32, #tpu.memory_space<vmem>>, vector<1x64xf32>
    %4 = vector.broadcast %3 : vector<1x64xf32> to vector<8x64xf32>
    %5 = arith.addf %2, %4 : vector<8x64xf32>
    %cst_5 = arith.constant 0.000000e+00 : f32
    %6 = vector.broadcast %cst_5 : f32 to vector<8x64xf32>
    %7 = arith.maximumf %5, %6 : vector<8x64xf32>
    %c0_6 = arith.constant 0 : index
    %c0_7 = arith.constant 0 : index
    %8 = vector.load %arg4[%c0_6, %c0_7] : memref<64x16xf32, #tpu.memory_space<vmem>>, vector<64x16xf32>
    %cst_8 = arith.constant dense<0.000000e+00> : vector<8x16xf32>
    %9 = tpu.matmul %7, %8, %cst_8 {dimension_numbers = #tpu.dot_dimension_numbers<[1], [0], [0], [1], [0, 0, 1, 1], [], []>} : vector<8x64xf32>, vector<64x16xf32>, vector<8x16xf32> -> vector<8x16xf32>
    %c0_9 = arith.constant 0 : index
    %c0_10 = arith.constant 0 : index
    %10 = vector.load %arg5[%c0_9, %c0_10] : memref<1x16xf32, #tpu.memory_space<vmem>>, vector<1x16xf32>
    %11 = vector.broadcast %10 : vector<1x16xf32> to vector<8x16xf32>
    %12 = arith.addf %9, %11 : vector<8x16xf32>
    %cst_11 = arith.constant 0.000000e+00 : f32
    %13 = vector.broadcast %cst_11 : f32 to vector<8x16xf32>
    %14 = arith.maximumf %12, %13 : vector<8x16xf32>
    %c0_12 = arith.constant 0 : index
    %c0_13 = arith.constant 0 : index
    %15 = vector.load %arg6[%c0_12, %c0_13] : memref<16x2xf32, #tpu.memory_space<vmem>>, vector<16x2xf32>
    %cst_14 = arith.constant dense<0.000000e+00> : vector<8x2xf32>
    %16 = tpu.matmul %14, %15, %cst_14 {dimension_numbers = #tpu.dot_dimension_numbers<[1], [0], [0], [1], [0, 0, 1, 1], [], []>} : vector<8x16xf32>, vector<16x2xf32>, vector<8x2xf32> -> vector<8x2xf32>
    %c0_15 = arith.constant 0 : index
    %c0_16 = arith.constant 0 : index
    %17 = vector.load %arg7[%c0_15, %c0_16] : memref<1x2xf32, #tpu.memory_space<vmem>>, vector<1x2xf32>
    %18 = vector.broadcast %17 : vector<1x2xf32> to vector<8x2xf32>
    %19 = arith.addf %16, %18 : vector<8x2xf32>
    %c0_17 = arith.constant 0 : index
    %c0_18 = arith.constant 0 : index
    %20 = vector.load %arg8[%c0_17, %c0_18] : memref<8x2xf32, #tpu.memory_space<vmem>>, vector<8x2xf32>
    tpu.vector_store %arg8[%c0_17, %c0_18], %19 {strides = array<i32>} : memref<8x2xf32, #tpu.memory_space<vmem>>, vector<8x2xf32>,
    return
  }
  func.func @transform_0(%arg0: i32) -> (i32, i32) {
    %c0_i32 = arith.constant 0 : i32
    %c0_i32_0 = arith.constant 0 : i32
    return %arg0, %c0_i32 : i32, i32
  }
  func.func @transform_1(%arg0: i32) -> (i32, i32) {
    %c0_i32 = arith.constant 0 : i32
    %c0_i32_0 = arith.constant 0 : i32
    %c0_i32_1 = arith.constant 0 : i32
    return %c0_i32, %c0_i32_0 : i32, i32
  }
  func.func @transform_2(%arg0: i32) -> (i32, i32) {
    %c0_i32 = arith.constant 0 : i32
    %c0_i32_0 = arith.constant 0 : i32
    %c0_i32_1 = arith.constant 0 : i32
    return %c0_i32, %c0_i32_0 : i32, i32
  }
  func.func @transform_3(%arg0: i32) -> (i32, i32) {
    %c0_i32 = arith.constant 0 : i32
    %c0_i32_0 = arith.constant 0 : i32
    %c0_i32_1 = arith.constant 0 : i32
    return %c0_i32, %c0_i32_0 : i32, i32
  }
  func.func @transform_4(%arg0: i32) -> (i32, i32) {
    %c0_i32 = arith.constant 0 : i32
    %c0_i32_0 = arith.constant 0 : i32
    %c0_i32_1 = arith.constant 0 : i32
    return %c0_i32, %c0_i32_0 : i32, i32
  }
  func.func @transform_5(%arg0: i32) -> (i32, i32) {
    %c0_i32 = arith.constant 0 : i32
    %c0_i32_0 = arith.constant 0 : i32
    %c0_i32_1 = arith.constant 0 : i32
    return %c0_i32, %c0_i32_0 : i32, i32
  }
  func.func @transform_6(%arg0: i32) -> (i32, i32) {
    %c0_i32 = arith.constant 0 : i32
    %c0_i32_0 = arith.constant 0 : i32
    %c0_i32_1 = arith.constant 0 : i32
    return %c0_i32, %c0_i32_0 : i32, i32
  }
  func.func @transform_7(%arg0: i32) -> (i32, i32) {
    %c0_i32 = arith.constant 0 : i32
    %c0_i32_0 = arith.constant 0 : i32
    return %arg0, %c0_i32 : i32, i32
  }
}

</mosaic_0001>

<llo_original>
// kernel: tpu_custom_call.1
$region0: #{tpu_custom_call.1}
  #allocation0 [shape = 'u32[]', space=smem, size = 0x4, offset = 0x4, fixed_abs, tag = 'smem constant byte address 0x4 - core index']
  #allocation1 [shape = 'u32[72,128]{1,0:T(1,128)}', space=vmem, size = 0x9000, scoped, tag = 'internal scratch']
  %s0 = inlined_call_operand.vmem [shape: f32[8,32], index: 0, kind: input, shape index: {}]
  %s1 = inlined_call_operand.vmem [shape: f32[32,64], index: 1, kind: input, shape index: {}]
  %s2 = inlined_call_operand.vmem [shape: f32[1,64], index: 2, kind: input, shape index: {}]
  %s3 = inlined_call_operand.vmem [shape: f32[64,16], index: 3, kind: input, shape index: {}]
  %s4 = inlined_call_operand.vmem [shape: f32[1,16], index: 4, kind: input, shape index: {}]
  %s5 = inlined_call_operand.vmem [shape: f32[16,2], index: 5, kind: input, shape index: {}]
  %s6 = inlined_call_operand.vmem [shape: f32[1,2], index: 6, kind: input, shape index: {}]
  %s7 = inlined_call_operand.vmem [shape: f32[8,2], index: 7, kind: output, shape index: {}]
  %s8 = sld [smem:[#allocation0]]
  $region38: #{tpu_custom_call.1} parent=0
    _
  %s10 = ssub.s32 1, %s8
  %s11 = scalar_select 0, %s10, %s8
  // Predicated region
  $region2: #{tpu_custom_call.1} parent=0 // pred_check
    _
  $region3: #{tpu_custom_call.1} parent=0 // pred_check_branch
    %13 = sbr.rel (0) target = $region5
  $region4: #{tpu_custom_call.1} parent=0 // pred_region
    _
  $region5: #{tpu_custom_call.1} parent=0 // pred_fallthru
    _
  // Predicated region
  $region6: #{tpu_custom_call.1} parent=0 // pred_check
    _
  $region7: #{tpu_custom_call.1} parent=0 // pred_check_branch
    %15 = sbr.rel (0) target = $region9
  $region8: #{tpu_custom_call.1} parent=0 // pred_region
    _
  $region9: #{tpu_custom_call.1} parent=0 // pred_fallthru
    _
  // Predicated region
  $region10: #{tpu_custom_call.1} parent=0 // pred_check
    _
  $region11: #{tpu_custom_call.1} parent=0 // pred_check_branch
    %17 = sbr.rel (0) target = $region13
  $region12: #{tpu_custom_call.1} parent=0 // pred_region
    _
  $region13: #{tpu_custom_call.1} parent=0 // pred_fallthru
    _
  // Predicated region
  $region14: #{tpu_custom_call.1} parent=0 // pred_check
    _
  $region15: #{tpu_custom_call.1} parent=0 // pred_check_branch
    %19 = sbr.rel (0) target = $region17
  $region16: #{tpu_custom_call.1} parent=0 // pred_region
    _
  $region17: #{tpu_custom_call.1} parent=0 // pred_fallthru
    _
  // Predicated region
  $region18: #{tpu_custom_call.1} parent=0 // pred_check
    _
  $region19: #{tpu_custom_call.1} parent=0 // pred_check_branch
    %21 = sbr.rel (0) target = $region21
  $region20: #{tpu_custom_call.1} parent=0 // pred_region
    _
  $region21: #{tpu_custom_call.1} parent=0 // pred_fallthru
    _
  // Predicated region
  $region22: #{tpu_custom_call.1} parent=0 // pred_check
    _
  $region23: #{tpu_custom_call.1} parent=0 // pred_check_branch
    %23 = sbr.rel (0) target = $region25
  $region24: #{tpu_custom_call.1} parent=0 // pred_region
    _
  $region25: #{tpu_custom_call.1} parent=0 // pred_fallthru
    _
  // Predicated region
  $region26: #{tpu_custom_call.1} parent=0 // pred_check
    _
  $region27: #{tpu_custom_call.1} parent=0 // pred_check_branch
    %25 = sbr.rel (0) target = $region29
  $region28: #{tpu_custom_call.1} parent=0 // pred_region
    _
  $region29: #{tpu_custom_call.1} parent=0 // pred_fallthru
    _
  %v26 = vld [vmem:[%s0] sm:$0xff]
  %v27 = vld [vmem:[%s1] sm:$0xff]
  %v28 = vld [vmem:[%s1 + $0x8] sm:$0xff]
  %v29 = vld [vmem:[%s1 + $0x10] sm:$0xff]
  %v30 = vld [vmem:[%s1 + $0x18] sm:$0xff]
  %v31 = vld [vmem:[%s2] sm:$0x1]
  %v33 = vperm.slane %v31, 0
  %vm35 = vcmask 261120
  %v37 = vsel %vm35, %v26, 0
  %39 = vmatpush.msra.mxu0 0.0
  %40 = vmatpush.msra.mxu0 0.0
  %41 = vmatpush.msra.mxu0 0.0
  %42 = vmatpush.msra.mxu0 0.0
  %43 = vmatpush.msra.mxu0 0.0
  %44 = vmatpush.msra.mxu0 0.0
  %45 = vmatpush.msra.mxu0 0.0
  %46 = vmatpush.msra.mxu0 0.0
  %47 = vmatpush.msra.mxu0 0.0
  %48 = vmatpush.msra.mxu0 0.0
  %49 = vmatpush.msra.mxu0 0.0
  %50 = vmatpush.msra.mxu0 0.0
  %51 = vmatpush.msra.mxu0 %v30
  %52 = vmatpush.msra.mxu0 %v29
  %53 = vmatpush.msra.mxu0 %v28
  %54 = vmatpush.msra.mxu0 %v27
  %55 = vmatmul.f32.gmra.mxu0 %v37
  %v56 = vpop.f32.mrf.mxu0
  %v57 = vadd.f32 %v33, %v56
  %58 = vdwg.mxu0
  %v59 = vmax.f32 %v57, 0.0
  %v60 = vld [vmem:[%s3] sm:$0xff]
  %v61 = vld [vmem:[%s3 + $0x8] sm:$0xff]
  %v62 = vld [vmem:[%s3 + $0x10] sm:$0xff]
  %v63 = vld [vmem:[%s3 + $0x18] sm:$0xff]
  %v64 = vld [vmem:[%s3 + $0x20] sm:$0xff]
  %v65 = vld [vmem:[%s3 + $0x28] sm:$0xff]
  %v66 = vld [vmem:[%s3 + $0x30] sm:$0xff]
  %v67 = vld [vmem:[%s3 + $0x38] sm:$0xff]
  %v68 = vld [vmem:[%s4] sm:$0x1]
  %v70 = vperm.slane %v68, 0
  %vm72 = vcmask 523264
  %v74 = vsel %vm72, %v59, 0
  %76 = vmatpush.msra.mxu0 0.0
  %77 = vmatpush.msra.mxu0 0.0
  %78 = vmatpush.msra.mxu0 0.0
  %79 = vmatpush.msra.mxu0 0.0
  %80 = vmatpush.msra.mxu0 0.0
  %81 = vmatpush.msra.mxu0 0.0
  %82 = vmatpush.msra.mxu0 0.0
  %83 = vmatpush.msra.mxu0 0.0
  %84 = vmatpush.msra.mxu0 %v67
  %85 = vmatpush.msra.mxu0 %v66
  %86 = vmatpush.msra.mxu0 %v65
  %87 = vmatpush.msra.mxu0 %v64
  %88 = vmatpush.msra.mxu0 %v63
  %89 = vmatpush.msra.mxu0 %v62
  %90 = vmatpush.msra.mxu0 %v61
  %91 = vmatpush.msra.mxu0 %v60
  %92 = vmatmul.f32.gmra.mxu0 %v74
  %v93 = vpop.f32.mrf.mxu0
  %v94 = vadd.f32 %v70, %v93
  %95 = vdwg.mxu0
  %v96 = vmax.f32 %v94, 0.0
  %v97 = vld [vmem:[%s5] sm:$0xff]
  %v98 = vld [vmem:[%s5 + $0x8] sm:$0xff]
  %v99 = vld [vmem:[%s6] sm:$0x1]
  %v101 = vperm.slane %v99, 0
  %vm103 = vcmask 130048
  %v105 = vsel %vm103, %v96, 0
  %107 = vmatpush.msra.mxu0 0.0
  %108 = vmatpush.msra.mxu0 0.0
  %109 = vmatpush.msra.mxu0 0.0
  %110 = vmatpush.msra.mxu0 0.0
  %111 = vmatpush.msra.mxu0 0.0
  %112 = vmatpush.msra.mxu0 0.0
  %113 = vmatpush.msra.mxu0 0.0
  %114 = vmatpush.msra.mxu0 0.0
  %115 = vmatpush.msra.mxu0 0.0
  %116 = vmatpush.msra.mxu0 0.0
  %117 = vmatpush.msra.mxu0 0.0
  %118 = vmatpush.msra.mxu0 0.0
  %119 = vmatpush.msra.mxu0 0.0
  %120 = vmatpush.msra.mxu0 0.0
  %121 = vmatpush.msra.mxu0 %v98
  %122 = vmatpush.msra.mxu0 %v97
  %123 = vmatmul.f32.gmra.mxu0 %v105
  %v124 = vpop.f32.mrf.mxu0
  %v125 = vadd.f32 %v101, %v124
  %126 = vdwg.mxu0
  %vm127 = vcmask 15360
  %128 = vst.msk [vmem:[%s7] sm:$0xff] %vm127, %v125
  // Predicated region
  $region30: #{tpu_custom_call.1} parent=0 // pred_check
    _
  $region31: #{tpu_custom_call.1} parent=0 // pred_check_branch
    %130 = sbr.rel (0) target = $region33
  $region32: #{tpu_custom_call.1} parent=0 // pred_region
    _
  $region33: #{tpu_custom_call.1} parent=0 // pred_fallthru
    _
  // Predicated region
  $region34: #{tpu_custom_call.1} parent=0 // pred_check
    _
  $region35: #{tpu_custom_call.1} parent=0 // pred_check_branch
    %132 = sbr.rel (0) target = $region37
  $region36: #{tpu_custom_call.1} parent=0 // pred_region
    _
  $region37: #{tpu_custom_call.1} parent=0 // pred_fallthru
    _

</llo_original>
